<compile_context>
chip_gen: v5e
topology: v5e:2x2
jax: 0.10.0
libtpu: 0.0.40
codegen_flags: <defaults>
</compile_context>

<pallas_src>
import functools

import jax
import jax.numpy as jnp
from jax.experimental import pallas as pl
from jax.experimental.pallas import tpu as pltpu

EPS = 1e-5
H1, H2 = 64, 32
TILE_M_MAX = 8192                       # rows per tile in the tiled fallback
FUSED_BUDGET_BYTES = 16 * 1024 * 1024   # VMEM working-set cap for fused path
VMEM_LIMIT = 48 * 1024 * 1024           # <= v7x physical 64 MiB


def _cdiv(a, b):
    return (a + b - 1) // b


def _round_up(a, b):
    return _cdiv(a, b) * b


# ----------------------------- fused kernel ---------------------------------
def _fused_kernel(x_ref, w1_ref, g1_ref, be1_ref, w2_ref, g2_ref, be2_ref,
                  w3_ref, b3_ref, out_ref, *, inv_n, n_valid, mask_rows):
    """Whole forward, whole batch in VMEM: fc1 -> bn1 -> relu -> fc2 -> bn2
    -> relu -> fc3. BN stats computed in-kernel (once, not per-tile)."""
    h1 = jnp.dot(x_ref[...], w1_ref[...], preferred_element_type=jnp.float32)
    # Zero-padded rows give h1 == 0 (fc1 bias dropped), so bn1 sums are exact.
    mu1 = jnp.sum(h1, axis=0, keepdims=True) * inv_n
    var1 = jnp.maximum(
        jnp.sum(h1 * h1, axis=0, keepdims=True) * inv_n - mu1 * mu1, 0.0)
    sc1 = g1_ref[...] * jax.lax.rsqrt(var1 + EPS)
    sh1 = be1_ref[...] - mu1 * sc1
    h1n = jnp.maximum(h1 * sc1 + sh1, 0.0)

    h2 = jnp.dot(h1n, w2_ref[...], preferred_element_type=jnp.float32)
    h2s = h2
    if mask_rows:  # padded rows are relu(sh1) @ W2 != 0 -> exclude from stats
        row = jax.lax.broadcasted_iota(jnp.int32, (h2.shape[0], 1), 0)
        h2s = jnp.where(row < n_valid, h2, 0.0)
    mu2 = jnp.sum(h2s, axis=0, keepdims=True) * inv_n
    var2 = jnp.maximum(
        jnp.sum(h2s * h2s, axis=0, keepdims=True) * inv_n - mu2 * mu2, 0.0)
    sc2 = g2_ref[...] * jax.lax.rsqrt(var2 + EPS)
    sh2 = be2_ref[...] - mu2 * sc2
    h2n = jnp.maximum(h2 * sc2 + sh2, 0.0)

    out_ref[...] = (jnp.dot(h2n, w3_ref[...], preferred_element_type=jnp.float32)
                    + b3_ref[...])


# ----------------------------- tiled kernels --------------------------------
def _stats1_kernel(x_ref, w1_ref, s1_ref, ss1_ref):
    """Pass 1: per-tile PARTIAL sum / sum-of-squares of h1 = x @ W1."""
    h1 = jnp.dot(x_ref[...], w1_ref[...], preferred_element_type=jnp.float32)
    s1_ref[...] = jnp.sum(h1, axis=0, keepdims=True)[None]
    ss1_ref[...] = jnp.sum(h1 * h1, axis=0, keepdims=True)[None]


def _stats2_kernel(x_ref, w1_ref, sc1_ref, sh1_ref, w2_ref, s2_ref, ss2_ref,
                   *, tile_m, n_valid, mask_rows):
    """Pass 2: recompute h1, apply folded bn1 + relu, h2 = . @ W2, emit
    per-tile PARTIAL bn2 stats. h2 is NOT written to HBM."""
    h1 = jnp.dot(x_ref[...], w1_ref[...], preferred_element_type=jnp.float32)
    h1n = jnp.maximum(h1 * sc1_ref[...] + sh1_ref[...], 0.0)
    h2 = jnp.dot(h1n, w2_ref[...], preferred_element_type=jnp.float32)
    if mask_rows:  # only emitted when the batch was zero-padded
        row = (pl.program_id(0) * tile_m
               + jax.lax.broadcasted_iota(jnp.int32, (tile_m, 1), 0))
        h2 = jnp.where(row < n_valid, h2, 0.0)
    s2_ref[...] = jnp.sum(h2, axis=0, keepdims=True)[None]
    ss2_ref[...] = jnp.sum(h2 * h2, axis=0, keepdims=True)[None]


def _apply_kernel(x_ref, w1_ref, sc1_ref, sh1_ref, w2_ref, sc2_ref, sh2_ref,
                  w3_ref, b3_ref, out_ref):
    """Pass 3: recompute h1/h2 from x with the folded BN scale/shifts, fc3."""
    h1 = jnp.dot(x_ref[...], w1_ref[...], preferred_element_type=jnp.float32)
    h1n = jnp.maximum(h1 * sc1_ref[...] + sh1_ref[...], 0.0)
    h2 = jnp.dot(h1n, w2_ref[...], preferred_element_type=jnp.float32)
    h2n = jnp.maximum(h2 * sc2_ref[...] + sh2_ref[...], 0.0)
    out_ref[...] = (jnp.dot(h2n, w3_ref[...], preferred_element_type=jnp.float32)
                    + b3_ref[...])
    # TODO(synk): for out_dim == 1 this (tile_m, 1) store is lane-sparse
    # (vst.msk); output traffic is <1% of total here so the simple MXU form is
    # kept instead of a VPU dot + lane-major (n_pad,) output.


# ----------------------------- wrapper ---------------------------------------
def _fold_bn(s_parts, ss_parts, gamma, beta, inv_n):
    """Reduce per-tile partial sums and fold BN into per-column scale/shift."""
    s = jnp.sum(s_parts, axis=(0, 1))[None, :]
    ss = jnp.sum(ss_parts, axis=(0, 1))[None, :]
    mu = s * inv_n
    var = jnp.maximum(ss * inv_n - mu * mu, 0.0)   # clamp: cancellation safety
    sc = gamma * jax.lax.rsqrt(var + EPS)
    sh = beta - mu * sc
    return sc, sh


def _forward_fused(x, params, out_dim):
    n, d_in = x.shape
    n_pad = _round_up(n, 8)
    if n_pad != n:
        x = jnp.pad(x, ((0, n_pad - n), (0, 0)))

    kernel = functools.partial(_fused_kernel, inv_n=1.0 / float(n),
                               n_valid=n, mask_rows=(n_pad != n))
    full = lambda i: (0, 0)
    out = pl.pallas_call(
        kernel,
        out_shape=jax.ShapeDtypeStruct((n_pad, out_dim), jnp.float32),
        grid=(1,),
        in_specs=[pl.BlockSpec((n_pad, d_in), full),
                  pl.BlockSpec((d_in, H1), full),
                  pl.BlockSpec((1, H1), full),
                  pl.BlockSpec((1, H1), full),
                  pl.BlockSpec((H1, H2), full),
                  pl.BlockSpec((1, H2), full),
                  pl.BlockSpec((1, H2), full),
                  pl.BlockSpec((H2, out_dim), full),
                  pl.BlockSpec((1, out_dim), full)],
        out_specs=pl.BlockSpec((n_pad, out_dim), full),
        compiler_params=pltpu.CompilerParams(
            dimension_semantics=("arbitrary",),
            vmem_limit_bytes=VMEM_LIMIT),
    )(x, params["w1"], params["g1"], params["be1"], params["w2"],
      params["g2"], params["be2"], params["w3"], params["b3"])
    return out[:n]


def _pick_tile_m(n, d_in):
    # Keep one x tile around <= 4 MiB (it is double-buffered) while amortizing
    # the ~600-cycle per-grid-step overhead; balance tiles so padding < 8 rows.
    cap = min(TILE_M_MAX, max(8, ((4 << 20) // (4 * d_in)) // 8 * 8))
    num_tiles = _cdiv(n, cap)
    return _round_up(_cdiv(n, num_tiles), 8)


def _forward_tiled(x, params, out_dim, tile_m):
    n, d_in = x.shape
    if tile_m is None:
        tile_m = _pick_tile_m(n, d_in)
    assert tile_m % 8 == 0
    num_tiles = _cdiv(n, tile_m)
    n_pad = num_tiles * tile_m
    if n_pad != n:
        x = jnp.pad(x, ((0, n_pad - n), (0, 0)))

    inv_n = 1.0 / float(n)
    const = lambda i: (0, 0)        # weights / folded BN: DMA'd once, resident
    row_tile = lambda i: (i, 0)     # batch-tiled arrays advance with the grid
    stat_tile = lambda i: (i, 0, 0)  # per-tile partial stats

    cp_par = pltpu.CompilerParams(dimension_semantics=("parallel",),
                                  vmem_limit_bytes=VMEM_LIMIT)

    # ---- pass 1: per-tile partial bn1 statistics ----------------------------
    s1p, ss1p = pl.pallas_call(
        _stats1_kernel,
        out_shape=(jax.ShapeDtypeStruct((num_tiles, 1, H1), jnp.float32),
                   jax.ShapeDtypeStruct((num_tiles, 1, H1), jnp.float32)),
        grid=(num_tiles,),
        in_specs=[pl.BlockSpec((tile_m, d_in), row_tile),
                  pl.BlockSpec((d_in, H1), const)],
        out_specs=(pl.BlockSpec((1, 1, H1), stat_tile),
                   pl.BlockSpec((1, 1, H1), stat_tile)),
        compiler_params=cp_par,
    )(x, params["w1"])
    sc1, sh1 = _fold_bn(s1p, ss1p, params["g1"], params["be1"], inv_n)

    # ---- pass 2: per-tile partial bn2 statistics (no h2 HBM write) ----------
    kernel2 = functools.partial(_stats2_kernel, tile_m=tile_m, n_valid=n,
                                mask_rows=(n_pad != n))
    s2p, ss2p = pl.pallas_call(
        kernel2,
        out_shape=(jax.ShapeDtypeStruct((num_tiles, 1, H2), jnp.float32),
                   jax.ShapeDtypeStruct((num_tiles, 1, H2), jnp.float32)),
        grid=(num_tiles,),
        in_specs=[pl.BlockSpec((tile_m, d_in), row_tile),
                  pl.BlockSpec((d_in, H1), const),
                  pl.BlockSpec((1, H1), const),
                  pl.BlockSpec((1, H1), const),
                  pl.BlockSpec((H1, H2), const)],
        out_specs=(pl.BlockSpec((1, 1, H2), stat_tile),
                   pl.BlockSpec((1, 1, H2), stat_tile)),
        compiler_params=cp_par,
    )(x, params["w1"], sc1, sh1, params["w2"])
    sc2, sh2 = _fold_bn(s2p, ss2p, params["g2"], params["be2"], inv_n)

    # ---- pass 3: recompute h1/h2 with folded BN, fc3 -------------------------
    out = pl.pallas_call(
        _apply_kernel,
        out_shape=jax.ShapeDtypeStruct((n_pad, out_dim), jnp.float32),
        grid=(num_tiles,),
        in_specs=[pl.BlockSpec((tile_m, d_in), row_tile),
                  pl.BlockSpec((d_in, H1), const),
                  pl.BlockSpec((1, H1), const),
                  pl.BlockSpec((1, H1), const),
                  pl.BlockSpec((H1, H2), const),
                  pl.BlockSpec((1, H2), const),
                  pl.BlockSpec((1, H2), const),
                  pl.BlockSpec((H2, out_dim), const),
                  pl.BlockSpec((1, out_dim), const)],
        out_specs=pl.BlockSpec((tile_m, out_dim), row_tile),
        compiler_params=cp_par,
    )(x, params["w1"], sc1, sh1, params["w2"], sc2, sh2,
      params["w3"], params["b3"])
    return out[:n]


def in_chip_temp_pred_forward(x, params, *, tile_m=None, force_tiled=False):
    """Forward pass of InChipTempPredModel (training-mode BN)."""
    n, d_in = x.shape
    out_dim = params["w3"].shape[1]
    x = x.astype(jnp.float32)
    # Rough fused-kernel working set (x double-buffered + h1/h2 temporaries).
    fused_bytes = 4 * n * (2 * d_in + 2 * H1 + 3 * H2 + max(out_dim, 1))
    if (not force_tiled) and tile_m is None and fused_bytes <= FUSED_BUDGET_BYTES:
        return _forward_fused(x, params, out_dim)
    return _forward_tiled(x, params, out_dim, tile_m)


# ----------------------------- test harness ----------------------------------
def init_params(key, input_dim, output_dim=1):
    """Deterministic synthetic parameters matching the nn.Module shapes."""
    ks = jax.random.split(key, 6)

    def lin(kw, kb, fan_in, fan_out):
        bound = 1.0 / jnp.sqrt(fan_in)
        w = jax.random.uniform(kw, (fan_in, fan_out), jnp.float32, -bound, bound)
        b = jax.random.uniform(kb, (1, fan_out), jnp.float32, -bound, bound)
        return w, b

    w1, b1 = lin(ks[0], ks[1], input_dim, H1)
    w2, b2 = lin(ks[2], ks[3], H1, H2)
    w3, b3 = lin(ks[4], ks[5], H2, output_dim)

    return {
        "w1": w1, "b1": b1,   # b1/b2 cancel under training-mode BN (not DMA'd)
        "g1": jnp.ones((1, H1), jnp.float32), "be1": jnp.zeros((1, H1), jnp.float32),
        "w2": w2, "b2": b2,
        "g2": jnp.ones((1, H2), jnp.float32), "be2": jnp.zeros((1, H2), jnp.float32),
        "w3": w3, "b3": b3,
    }


def _reference_forward(x, p):
    """Plain-JAX reference mirroring the PyTorch forward (training-mode BN)."""
    h = x @ p["w1"] + p["b1"]
    mu, var = jnp.mean(h, 0, keepdims=True), jnp.var(h, 0, keepdims=True)
    h = jnp.maximum((h - mu) / jnp.sqrt(var + EPS) * p["g1"] + p["be1"], 0.0)
    h2 = h @ p["w2"] + p["b2"]
    mu2, var2 = jnp.mean(h2, 0, keepdims=True), jnp.var(h2, 0, keepdims=True)
    h2 = jnp.maximum((h2 - mu2) / jnp.sqrt(var2 + EPS) * p["g2"] + p["be2"], 0.0)
    return h2 @ p["w3"] + p["b3"]


if __name__ == "__main__":
    key = jax.random.PRNGKey(0)
    k_x, k_x2, k_p = jax.random.split(key, 3)

    input_dim, output_dim = 32, 1
    params = init_params(k_p, input_dim, output_dim)

    # Case 1: fused single-launch path (small batch, whole batch VMEM-resident).
    x = jax.random.normal(k_x, (8, input_dim), jnp.float32)
    out = jax.block_until_ready(in_chip_temp_pred_forward(x, params))
    ref = _reference_forward(x, params)
    assert out.shape == (8, output_dim)
    assert jnp.allclose(out, ref, atol=1e-4, rtol=1e-4)

    # Case 2: fused path with a non-multiple-of-8 batch (row masking for bn2).
    x2 = jax.random.normal(k_x2, (20, input_dim), jnp.float32)
    out2 = jax.block_until_ready(in_chip_temp_pred_forward(x2, params))
    ref2 = _reference_forward(x2, params)
    assert out2.shape == (20, output_dim)
    assert jnp.allclose(out2, ref2, atol=1e-4, rtol=1e-4)

    # Case 3: tiled fallback (forced small tile) exercising the cross-tile
    # partial-stats reduction, padding/masking, and h2 recompute.
    out3 = jax.block_until_ready(
        in_chip_temp_pred_forward(x2, params, tile_m=8))
    assert out3.shape == (20, output_dim)
    assert jnp.allclose(out3, ref2, atol=1e-4, rtol=1e-4)

    print("KERNEL_OK")
</pallas_src>

<mosaic_0001>
module attributes {stable_mosaic.version = 11 : i64} {
  func.func @_fused_kernel(%arg0: i32, %arg1: memref<8x32xf32, #tpu.memory_space<vmem>>, %arg2: memref<32x64xf32, #tpu.memory_space<vmem>>, %arg3: memref<1x64xf32, #tpu.memory_space<vmem>>, %arg4: memref<1x64xf32, #tpu.memory_space<vmem>>, %arg5: memref<64x32xf32, #tpu.memory_space<vmem>>, %arg6: memref<1x32xf32, #tpu.memory_space<vmem>>, %arg7: memref<1x32xf32, #tpu.memory_space<vmem>>, %arg8: memref<32x1xf32, #tpu.memory_space<vmem>>, %arg9: memref<1x1xf32, #tpu.memory_space<vmem>>, %arg10: memref<8x1xf32, #tpu.memory_space<vmem>>) attributes {dimension_semantics = [#tpu.dimension_semantics<arbitrary>], iteration_bounds = array<i64: 1>, scalar_prefetch = 0 : i64, scratch_operands = 0 : i64, tpu.core_type = #tpu.core_type<tc>, window_params = [{pipeline_mode = #tpu.pipeline_mode<synchronous>, transform_indices = @transform_0, window_bounds = array<i64: 8, 32>}, {pipeline_mode = #tpu.pipeline_mode<synchronous>, transform_indices = @transform_1, window_bounds = array<i64: 32, 64>}, {pipeline_mode = #tpu.pipeline_mode<synchronous>, transform_indices = @transform_2, window_bounds = array<i64: 1, 64>}, {pipeline_mode = #tpu.pipeline_mode<synchronous>, transform_indices = @transform_3, window_bounds = array<i64: 1, 64>}, {pipeline_mode = #tpu.pipeline_mode<synchronous>, transform_indices = @transform_4, window_bounds = array<i64: 64, 32>}, {pipeline_mode = #tpu.pipeline_mode<synchronous>, transform_indices = @transform_5, window_bounds = array<i64: 1, 32>}, {pipeline_mode = #tpu.pipeline_mode<synchronous>, transform_indices = @transform_6, window_bounds = array<i64: 1, 32>}, {pipeline_mode = #tpu.pipeline_mode<synchronous>, transform_indices = @transform_7, window_bounds = array<i64: 32, 1>}, {pipeline_mode = #tpu.pipeline_mode<synchronous>, transform_indices = @transform_8, window_bounds = array<i64: 1, 1>}, {pipeline_mode = #tpu.pipeline_mode<synchronous>, transform_indices = @transform_9, window_bounds = array<i64: 8, 1>}]} {
    %c0 = arith.constant 0 : index
    %c0_0 = arith.constant 0 : index
    %0 = vector.load %arg1[%c0, %c0_0] : memref<8x32xf32, #tpu.memory_space<vmem>>, vector<8x32xf32>
    %c0_1 = arith.constant 0 : index
    %c0_2 = arith.constant 0 : index
    %1 = vector.load %arg2[%c0_1, %c0_2] : memref<32x64xf32, #tpu.memory_space<vmem>>, vector<32x64xf32>
    %cst = arith.constant dense<0.000000e+00> : vector<8x64xf32>
    %2 = tpu.matmul %0, %1, %cst {dimension_numbers = #tpu.dot_dimension_numbers<[1], [0], [0], [1], [0, 0, 1, 1], [], []>} : vector<8x32xf32>, vector<32x64xf32>, vector<8x64xf32> -> vector<8x64xf32>
    %cst_3 = arith.constant dense<0.000000e+00> : vector<64xf32>
    %3 = vector.multi_reduction <add>, %2, %cst_3 [0] : vector<8x64xf32> to vector<64xf32>
    %4 = vector.shape_cast %3 : vector<64xf32> to vector<1x64xf32>
    %cst_4 = arith.constant 1.250000e-01 : f32
    %5 = vector.broadcast %cst_4 : f32 to vector<1x64xf32>
    %6 = arith.mulf %4, %5 : vector<1x64xf32>
    %7 = arith.mulf %2, %2 : vector<8x64xf32>
    %cst_5 = arith.constant dense<0.000000e+00> : vector<64xf32>
    %8 = vector.multi_reduction <add>, %7, %cst_5 [0] : vector<8x64xf32> to vector<64xf32>
    %9 = vector.shape_cast %8 : vector<64xf32> to vector<1x64xf32>
    %cst_6 = arith.constant 1.250000e-01 : f32
    %10 = vector.broadcast %cst_6 : f32 to vector<1x64xf32>
    %11 = arith.mulf %9, %10 : vector<1x64xf32>
    %12 = arith.mulf %6, %6 : vector<1x64xf32>
    %13 = arith.subf %11, %12 : vector<1x64xf32>
    %cst_7 = arith.constant 0.000000e+00 : f32
    %14 = vector.broadcast %cst_7 : f32 to vector<1x64xf32>
    %15 = arith.maximumf %13, %14 : vector<1x64xf32>
    %c0_8 = arith.constant 0 : index
    %c0_9 = arith.constant 0 : index
    %16 = vector.load %arg3[%c0_8, %c0_9] : memref<1x64xf32, #tpu.memory_space<vmem>>, vector<1x64xf32>
    %cst_10 = arith.constant 9.99999974E-6 : f32
    %17 = vector.broadcast %cst_10 : f32 to vector<1x64xf32>
    %18 = arith.addf %15, %17 : vector<1x64xf32>
    %19 = math.rsqrt %18 : vector<1x64xf32>
    %20 = arith.mulf %16, %19 : vector<1x64xf32>
    %c0_11 = arith.constant 0 : index
    %c0_12 = arith.constant 0 : index
    %21 = vector.load %arg4[%c0_11, %c0_12] : memref<1x64xf32, #tpu.memory_space<vmem>>, vector<1x64xf32>
    %22 = arith.mulf %6, %20 : vector<1x64xf32>
    %23 = arith.subf %21, %22 : vector<1x64xf32>
    %24 = vector.broadcast %20 : vector<1x64xf32> to vector<8x64xf32>
    %25 = arith.mulf %2, %24 : vector<8x64xf32>
    %26 = vector.broadcast %23 : vector<1x64xf32> to vector<8x64xf32>
    %27 = arith.addf %25, %26 : vector<8x64xf32>
    %cst_13 = arith.constant 0.000000e+00 : f32
    %28 = vector.broadcast %cst_13 : f32 to vector<8x64xf32>
    %29 = arith.maximumf %27, %28 : vector<8x64xf32>
    %c0_14 = arith.constant 0 : index
    %c0_15 = arith.constant 0 : index
    %30 = vector.load %arg5[%c0_14, %c0_15] : memref<64x32xf32, #tpu.memory_space<vmem>>, vector<64x32xf32>
    %cst_16 = arith.constant dense<0.000000e+00> : vector<8x32xf32>
    %31 = tpu.matmul %29, %30, %cst_16 {dimension_numbers = #tpu.dot_dimension_numbers<[1], [0], [0], [1], [0, 0, 1, 1], [], []>} : vector<8x64xf32>, vector<64x32xf32>, vector<8x32xf32> -> vector<8x32xf32>
    %cst_17 = arith.constant dense<0.000000e+00> : vector<32xf32>
    %32 = vector.multi_reduction <add>, %31, %cst_17 [0] : vector<8x32xf32> to vector<32xf32>
    %33 = vector.shape_cast %32 : vector<32xf32> to vector<1x32xf32>
    %cst_18 = arith.constant 1.250000e-01 : f32
    %34 = vector.broadcast %cst_18 : f32 to vector<1x32xf32>
    %35 = arith.mulf %33, %34 : vector<1x32xf32>
    %36 = arith.mulf %31, %31 : vector<8x32xf32>
    %cst_19 = arith.constant dense<0.000000e+00> : vector<32xf32>
    %37 = vector.multi_reduction <add>, %36, %cst_19 [0] : vector<8x32xf32> to vector<32xf32>
    %38 = vector.shape_cast %37 : vector<32xf32> to vector<1x32xf32>
    %cst_20 = arith.constant 1.250000e-01 : f32
    %39 = vector.broadcast %cst_20 : f32 to vector<1x32xf32>
    %40 = arith.mulf %38, %39 : vector<1x32xf32>
    %41 = arith.mulf %35, %35 : vector<1x32xf32>
    %42 = arith.subf %40, %41 : vector<1x32xf32>
    %cst_21 = arith.constant 0.000000e+00 : f32
    %43 = vector.broadcast %cst_21 : f32 to vector<1x32xf32>
    %44 = arith.maximumf %42, %43 : vector<1x32xf32>
    %c0_22 = arith.constant 0 : index
    %c0_23 = arith.constant 0 : index
    %45 = vector.load %arg6[%c0_22, %c0_23] : memref<1x32xf32, #tpu.memory_space<vmem>>, vector<1x32xf32>
    %cst_24 = arith.constant 9.99999974E-6 : f32
    %46 = vector.broadcast %cst_24 : f32 to vector<1x32xf32>
    %47 = arith.addf %44, %46 : vector<1x32xf32>
    %48 = math.rsqrt %47 : vector<1x32xf32>
    %49 = arith.mulf %45, %48 : vector<1x32xf32>
    %c0_25 = arith.constant 0 : index
    %c0_26 = arith.constant 0 : index
    %50 = vector.load %arg7[%c0_25, %c0_26] : memref<1x32xf32, #tpu.memory_space<vmem>>, vector<1x32xf32>
    %51 = arith.mulf %35, %49 : vector<1x32xf32>
    %52 = arith.subf %50, %51 : vector<1x32xf32>
    %53 = vector.broadcast %49 : vector<1x32xf32> to vector<8x32xf32>
    %54 = arith.mulf %31, %53 : vector<8x32xf32>
    %55 = vector.broadcast %52 : vector<1x32xf32> to vector<8x32xf32>
    %56 = arith.addf %54, %55 : vector<8x32xf32>
    %cst_27 = arith.constant 0.000000e+00 : f32
    %57 = vector.broadcast %cst_27 : f32 to vector<8x32xf32>
    %58 = arith.maximumf %56, %57 : vector<8x32xf32>
    %c0_28 = arith.constant 0 : index
    %c0_29 = arith.constant 0 : index
    %59 = vector.load %arg8[%c0_28, %c0_29] : memref<32x1xf32, #tpu.memory_space<vmem>>, vector<32x1xf32>
    %cst_30 = arith.constant dense<0.000000e+00> : vector<8x1xf32>
    %60 = tpu.matmul %58, %59, %cst_30 {dimension_numbers = #tpu.dot_dimension_numbers<[1], [0], [0], [1], [0, 0, 1, 1], [], []>} : vector<8x32xf32>, vector<32x1xf32>, vector<8x1xf32> -> vector<8x1xf32>
    %c0_31 = arith.constant 0 : index
    %c0_32 = arith.constant 0 : index
    %61 = vector.load %arg9[%c0_31, %c0_32] : memref<1x1xf32, #tpu.memory_space<vmem>>, vector<1x1xf32>
    %62 = vector.broadcast %61 : vector<1x1xf32> to vector<8x1xf32>
    %63 = arith.addf %60, %62 : vector<8x1xf32>
    %c0_33 = arith.constant 0 : index
    %c0_34 = arith.constant 0 : index
    %64 = vector.load %arg10[%c0_33, %c0_34] : memref<8x1xf32, #tpu.memory_space<vmem>>, vector<8x1xf32>
    tpu.vector_store %arg10[%c0_33, %c0_34], %63 {strides = array<i32>} : memref<8x1xf32, #tpu.memory_space<vmem>>, vector<8x1xf32>,
    return
  }
  func.func @transform_0(%arg0: i32) -> (i32, i32) {
    %c0_i32 = arith.constant 0 : i32
    %c0_i32_0 = arith.constant 0 : i32
    %c0_i32_1 = arith.constant 0 : i32
    return %c0_i32, %c0_i32_0 : i32, i32
  }
  func.func @transform_1(%arg0: i32) -> (i32, i32) {
    %c0_i32 = arith.constant 0 : i32
    %c0_i32_0 = arith.constant 0 : i32
    %c0_i32_1 = arith.constant 0 : i32
    return %c0_i32, %c0_i32_0 : i32, i32
  }
  func.func @transform_2(%arg0: i32) -> (i32, i32) {
    %c0_i32 = arith.constant 0 : i32
    %c0_i32_0 = arith.constant 0 : i32
    %c0_i32_1 = arith.constant 0 : i32
    return %c0_i32, %c0_i32_0 : i32, i32
  }
  func.func @transform_3(%arg0: i32) -> (i32, i32) {
    %c0_i32 = arith.constant 0 : i32
    %c0_i32_0 = arith.constant 0 : i32
    %c0_i32_1 = arith.constant 0 : i32
    return %c0_i32, %c0_i32_0 : i32, i32
  }
  func.func @transform_4(%arg0: i32) -> (i32, i32) {
    %c0_i32 = arith.constant 0 : i32
    %c0_i32_0 = arith.constant 0 : i32
    %c0_i32_1 = arith.constant 0 : i32
    return %c0_i32, %c0_i32_0 : i32, i32
  }
  func.func @transform_5(%arg0: i32) -> (i32, i32) {
    %c0_i32 = arith.constant 0 : i32
    %c0_i32_0 = arith.constant 0 : i32
    %c0_i32_1 = arith.constant 0 : i32
    return %c0_i32, %c0_i32_0 : i32, i32
  }
  func.func @transform_6(%arg0: i32) -> (i32, i32) {
    %c0_i32 = arith.constant 0 : i32
    %c0_i32_0 = arith.constant 0 : i32
    %c0_i32_1 = arith.constant 0 : i32
    return %c0_i32, %c0_i32_0 : i32, i32
  }
  func.func @transform_7(%arg0: i32) -> (i32, i32) {
    %c0_i32 = arith.constant 0 : i32
    %c0_i32_0 = arith.constant 0 : i32
    %c0_i32_1 = arith.constant 0 : i32
    return %c0_i32, %c0_i32_0 : i32, i32
  }
  func.func @transform_8(%arg0: i32) -> (i32, i32) {
    %c0_i32 = arith.constant 0 : i32
    %c0_i32_0 = arith.constant 0 : i32
    %c0_i32_1 = arith.constant 0 : i32
    return %c0_i32, %c0_i32_0 : i32, i32
  }
  func.func @transform_9(%arg0: i32) -> (i32, i32) {
    %c0_i32 = arith.constant 0 : i32
    %c0_i32_0 = arith.constant 0 : i32
    %c0_i32_1 = arith.constant 0 : i32
    return %c0_i32, %c0_i32_0 : i32, i32
  }
}

</mosaic_0001>

<llo_original>
// kernel: tpu_custom_call.1
$region0: #{tpu_custom_call.1}
  #allocation0 [shape = 'u32[]', space=smem, size = 0x4, offset = 0x4, fixed_abs, tag = 'smem constant byte address 0x4 - core index']
  #allocation1 [shape = 'u32[72,128]{1,0:T(1,128)}', space=vmem, size = 0x9000, scoped, tag = 'internal scratch']
  #allocation2 [shape = 'f32[1,1]{1,0:T(1,128)S(1)}', space=vmem, size = 0x200, scoped, tag = 'scoped memory for tpu_custom_call.1']
  %s0 = inlined_call_operand.vmem [shape: f32[8,32], index: 0, kind: input, shape index: {}]
  %s1 = inlined_call_operand.vmem [shape: f32[32,64], index: 1, kind: input, shape index: {}]
  %s2 = inlined_call_operand.vmem [shape: f32[1,64], index: 2, kind: input, shape index: {}]
  %s3 = inlined_call_operand.vmem [shape: f32[1,64], index: 3, kind: input, shape index: {}]
  %s4 = inlined_call_operand.vmem [shape: f32[64,32], index: 4, kind: input, shape index: {}]
  %s5 = inlined_call_operand.vmem [shape: f32[1,32], index: 5, kind: input, shape index: {}]
  %s6 = inlined_call_operand.vmem [shape: f32[1,32], index: 6, kind: input, shape index: {}]
  %s7 = inlined_call_operand.vmem [shape: f32[32,1], index: 7, kind: input, shape index: {}]
  %s8 = inlined_call_operand.<no memory space> [shape: f32[1,1], index: 8, kind: input, shape index: {}]
  %s9 = inlined_call_operand.vmem [shape: f32[8,1], index: 9, kind: output, shape index: {}]
  %s10 = sld [smem:[#allocation0]]
  $region46: #{tpu_custom_call.1} parent=0
    _
  %s12 = ssub.s32 1, %s10
  %s13 = scalar_select 0, %s12, %s10
  %v14 = vstv %s8
  %15 = vst [vmem:[#allocation2] sm:$0x1] %v14
  // Predicated region
  $region2: #{tpu_custom_call.1} parent=0 // pred_check
    _
  $region3: #{tpu_custom_call.1} parent=0 // pred_check_branch
    %17 = sbr.rel (0) target = $region5
  $region4: #{tpu_custom_call.1} parent=0 // pred_region
    _
  $region5: #{tpu_custom_call.1} parent=0 // pred_fallthru
    _
  // Predicated region
  $region6: #{tpu_custom_call.1} parent=0 // pred_check
    _
  $region7: #{tpu_custom_call.1} parent=0 // pred_check_branch
    %19 = sbr.rel (0) target = $region9
  $region8: #{tpu_custom_call.1} parent=0 // pred_region
    _
  $region9: #{tpu_custom_call.1} parent=0 // pred_fallthru
    _
  // Predicated region
  $region10: #{tpu_custom_call.1} parent=0 // pred_check
    _
  $region11: #{tpu_custom_call.1} parent=0 // pred_check_branch
    %21 = sbr.rel (0) target = $region13
  $region12: #{tpu_custom_call.1} parent=0 // pred_region
    _
  $region13: #{tpu_custom_call.1} parent=0 // pred_fallthru
    _
  // Predicated region
  $region14: #{tpu_custom_call.1} parent=0 // pred_check
    _
  $region15: #{tpu_custom_call.1} parent=0 // pred_check_branch
    %23 = sbr.rel (0) target = $region17
  $region16: #{tpu_custom_call.1} parent=0 // pred_region
    _
  $region17: #{tpu_custom_call.1} parent=0 // pred_fallthru
    _
  // Predicated region
  $region18: #{tpu_custom_call.1} parent=0 // pred_check
    _
  $region19: #{tpu_custom_call.1} parent=0 // pred_check_branch
    %25 = sbr.rel (0) target = $region21
  $region20: #{tpu_custom_call.1} parent=0 // pred_region
    _
  $region21: #{tpu_custom_call.1} parent=0 // pred_fallthru
    _
  // Predicated region
  $region22: #{tpu_custom_call.1} parent=0 // pred_check
    _
  $region23: #{tpu_custom_call.1} parent=0 // pred_check_branch
    %27 = sbr.rel (0) target = $region25
  $region24: #{tpu_custom_call.1} parent=0 // pred_region
    _
  $region25: #{tpu_custom_call.1} parent=0 // pred_fallthru
    _
  // Predicated region
  $region26: #{tpu_custom_call.1} parent=0 // pred_check
    _
  $region27: #{tpu_custom_call.1} parent=0 // pred_check_branch
    %29 = sbr.rel (0) target = $region29
  $region28: #{tpu_custom_call.1} parent=0 // pred_region
    _
  $region29: #{tpu_custom_call.1} parent=0 // pred_fallthru
    _
  // Predicated region
  $region30: #{tpu_custom_call.1} parent=0 // pred_check
    _
  $region31: #{tpu_custom_call.1} parent=0 // pred_check_branch
    %31 = sbr.rel (0) target = $region33
  $region32: #{tpu_custom_call.1} parent=0 // pred_region
    _
  $region33: #{tpu_custom_call.1} parent=0 // pred_fallthru
    _
  // Predicated region
  $region34: #{tpu_custom_call.1} parent=0 // pred_check
    _
  $region35: #{tpu_custom_call.1} parent=0 // pred_check_branch
    %33 = sbr.rel (0) target = $region37
  $region36: #{tpu_custom_call.1} parent=0 // pred_region
    _
  $region37: #{tpu_custom_call.1} parent=0 // pred_fallthru
    _
  %v34 = vld [vmem:[%s0] sm:$0xff]
  %v35 = vld [vmem:[%s1] sm:$0xff]
  %v36 = vld [vmem:[%s1 + $0x8] sm:$0xff]
  %v37 = vld [vmem:[%s1 + $0x10] sm:$0xff]
  %v38 = vld [vmem:[%s1 + $0x18] sm:$0xff]
  %vm39 = vcmask 261120
  %v41 = vsel %vm39, %v34, 0
  %43 = vmatpush.msra.mxu0 0.0
  %44 = vmatpush.msra.mxu0 0.0
  %45 = vmatpush.msra.mxu0 0.0
  %46 = vmatpush.msra.mxu0 0.0
  %47 = vmatpush.msra.mxu0 0.0
  %48 = vmatpush.msra.mxu0 0.0
  %49 = vmatpush.msra.mxu0 0.0
  %50 = vmatpush.msra.mxu0 0.0
  %51 = vmatpush.msra.mxu0 0.0
  %52 = vmatpush.msra.mxu0 0.0
  %53 = vmatpush.msra.mxu0 0.0
  %54 = vmatpush.msra.mxu0 0.0
  %55 = vmatpush.msra.mxu0 %v38
  %56 = vmatpush.msra.mxu0 %v37
  %57 = vmatpush.msra.mxu0 %v36
  %58 = vmatpush.msra.mxu0 %v35
  %59 = vmatmul.f32.gmra.mxu0 %v41
  %v60 = vpop.f32.mrf.mxu0
  %v61 = vadd.f32 0.0, %v60
  %62 = vdwg.mxu0
  %vm63 = vcmask 523264
  %v64 = vsel %vm63, %v61, 0.0
  %v65 = vrot.slane %v64, 4
  %v66 = vadd.f32 %v64, %v65
  %v67 = vrot.slane %v66, 2
  %v68 = vadd.f32 %v66, %v67
  %v69 = vrot.slane %v68, 1
  %v70 = vadd.f32 %v68, %v69
  %v71 = vmul.f32 %v70, 0.125
  %v72 = vmul.f32 %v61, %v61
  %v73 = vsel %vm63, %v72, 0.0
  %v74 = vrot.slane %v73, 4
  %v75 = vadd.f32 %v73, %v74
  %v76 = vrot.slane %v75, 2
  %v77 = vadd.f32 %v75, %v76
  %v78 = vrot.slane %v77, 1
  %v79 = vadd.f32 %v77, %v78
  %v80 = vmul.f32 %v79, 0.125
  %v81 = vmul.f32 %v71, %v71
  %v82 = vsub.f32 %v80, %v81
  %v83 = vmax.f32 %v82, 0.0
  %v84 = vld [vmem:[%s2] sm:$0x1]
  %v85 = vadd.f32 %v83, 1e-05
  %v86 = vrsqrt.pop %v85
  %v87 = vmul.f32 %v86, %v85
  %v88 = vmul.f32 %v87, %v86
  %v89 = vmul.f32 0.5, %v88
  %v90 = vsub.f32 1.5, %v89
  %v91 = vmul.f32 %v86, %v90
  %vm92 = vweird.f32 %v85
  %vm93 = vweird.f32 %v86
  %vm94 = vmor %vm92, %vm93
  %v95 = vsel %vm94, %v86, %v91
  %v96 = vmul.f32 %v84, %v95
  %v97 = vld [vmem:[%s3] sm:$0x1]
  %v98 = vmul.f32 %v71, %v96
  %v99 = vsub.f32 %v97, %v98
  %v101 = vperm.slane %v96, 0
  %v103 = vmul.f32 %v61, %v101
  %v105 = vperm.slane %v99, 0
  %v107 = vadd.f32 %v103, %v105
  %v108 = vmax.f32 %v107, 0.0
  %v109 = vld [vmem:[%s4] sm:$0xff]
  %v110 = vld [vmem:[%s4 + $0x8] sm:$0xff]
  %v111 = vld [vmem:[%s4 + $0x10] sm:$0xff]
  %v112 = vld [vmem:[%s4 + $0x18] sm:$0xff]
  %v113 = vld [vmem:[%s4 + $0x20] sm:$0xff]
  %v114 = vld [vmem:[%s4 + $0x28] sm:$0xff]
  %v115 = vld [vmem:[%s4 + $0x30] sm:$0xff]
  %v116 = vld [vmem:[%s4 + $0x38] sm:$0xff]
  %v118 = vsel %vm63, %v108, 0
  %120 = vmatpush.msra.mxu0 0.0
  %121 = vmatpush.msra.mxu0 0.0
  %122 = vmatpush.msra.mxu0 0.0
  %123 = vmatpush.msra.mxu0 0.0
  %124 = vmatpush.msra.mxu0 0.0
  %125 = vmatpush.msra.mxu0 0.0
  %126 = vmatpush.msra.mxu0 0.0
  %127 = vmatpush.msra.mxu0 0.0
  %128 = vmatpush.msra.mxu0 %v116
  %129 = vmatpush.msra.mxu0 %v115
  %130 = vmatpush.msra.mxu0 %v114
  %131 = vmatpush.msra.mxu0 %v113
  %132 = vmatpush.msra.mxu0 %v112
  %133 = vmatpush.msra.mxu0 %v111
  %134 = vmatpush.msra.mxu0 %v110
  %135 = vmatpush.msra.mxu0 %v109
  %136 = vmatmul.f32.gmra.mxu0 %v118
  %v137 = vpop.f32.mrf.mxu0
  %v138 = vadd.f32 0.0, %v137
  %139 = vdwg.mxu0
  %v140 = vsel %vm39, %v138, 0.0
  %v141 = vrot.slane %v140, 4
  %v142 = vadd.f32 %v140, %v141
  %v143 = vrot.slane %v142, 2
  %v144 = vadd.f32 %v142, %v143
  %v145 = vrot.slane %v144, 1
  %v146 = vadd.f32 %v144, %v145
  %v147 = vmul.f32 %v146, 0.125
  %v148 = vmul.f32 %v138, %v138
  %v149 = vsel %vm39, %v148, 0.0
  %v150 = vrot.slane %v149, 4
  %v151 = vadd.f32 %v149, %v150
  %v152 = vrot.slane %v151, 2
  %v153 = vadd.f32 %v151, %v152
  %v154 = vrot.slane %v153, 1
  %v155 = vadd.f32 %v153, %v154
  %v156 = vmul.f32 %v155, 0.125
  %v157 = vmul.f32 %v147, %v147
  %v158 = vsub.f32 %v156, %v157
  %v159 = vmax.f32 %v158, 0.0
  %v160 = vld [vmem:[%s5] sm:$0x1]
  %v161 = vadd.f32 %v159, 1e-05
  %v162 = vrsqrt.pop %v161
  %v163 = vmul.f32 %v162, %v161
  %v164 = vmul.f32 %v163, %v162
  %v165 = vmul.f32 0.5, %v164
  %v166 = vsub.f32 1.5, %v165
  %v167 = vmul.f32 %v162, %v166
  %vm168 = vweird.f32 %v161
  %vm169 = vweird.f32 %v162
  %vm170 = vmor %vm168, %vm169
  %v171 = vsel %vm170, %v162, %v167
  %v172 = vmul.f32 %v160, %v171
  %v173 = vld [vmem:[%s6] sm:$0x1]
  %v174 = vmul.f32 %v147, %v172
  %v175 = vsub.f32 %v173, %v174
  %v177 = vperm.slane %v172, 0
  %v179 = vmul.f32 %v138, %v177
  %v181 = vperm.slane %v175, 0
  %v183 = vadd.f32 %v179, %v181
  %v184 = vmax.f32 %v183, 0.0
  %v185 = vld [vmem:[%s7] sm:$0xff]
  %v186 = vld [vmem:[%s7 + $0x8] sm:$0xff]
  %v187 = vld [vmem:[%s7 + $0x10] sm:$0xff]
  %v188 = vld [vmem:[%s7 + $0x18] sm:$0xff]
  %v189 = vld [vmem:[#allocation2] sm:$0x1]
  %v191 = vperm.slane %v189, 0
  %v194 = vsel %vm39, %v184, 0
  %196 = vmatpush.msra.mxu0 0.0
  %197 = vmatpush.msra.mxu0 0.0
  %198 = vmatpush.msra.mxu0 0.0
  %199 = vmatpush.msra.mxu0 0.0
  %200 = vmatpush.msra.mxu0 0.0
  %201 = vmatpush.msra.mxu0 0.0
  %202 = vmatpush.msra.mxu0 0.0
  %203 = vmatpush.msra.mxu0 0.0
  %204 = vmatpush.msra.mxu0 0.0
  %205 = vmatpush.msra.mxu0 0.0
  %206 = vmatpush.msra.mxu0 0.0
  %207 = vmatpush.msra.mxu0 0.0
  %208 = vmatpush.msra.mxu0 %v188
  %209 = vmatpush.msra.mxu0 %v187
  %210 = vmatpush.msra.mxu0 %v186
  %211 = vmatpush.msra.mxu0 %v185
  %212 = vmatmul.f32.gmra.mxu0 %v194
  %v213 = vpop.f32.mrf.mxu0
  %v214 = vadd.f32 %v191, %v213
  %215 = vdwg.mxu0
  %vm216 = vcmask 7168
  %217 = vst.msk [vmem:[%s9] sm:$0xff] %vm216, %v214
  // Predicated region
  $region38: #{tpu_custom_call.1} parent=0 // pred_check
    _
  $region39: #{tpu_custom_call.1} parent=0 // pred_check_branch
    %219 = sbr.rel (0) target = $region41
  $region40: #{tpu_custom_call.1} parent=0 // pred_region
    _
  $region41: #{tpu_custom_call.1} parent=0 // pred_fallthru
    _
  // Predicated region
  $region42: #{tpu_custom_call.1} parent=0 // pred_check
    _
  $region43: #{tpu_custom_call.1} parent=0 // pred_check_branch
    %221 = sbr.rel (0) target = $region45
  $region44: #{tpu_custom_call.1} parent=0 // pred_region
    _
  $region45: #{tpu_custom_call.1} parent=0 // pred_fallthru
    _

</llo_original>
